<compile_context>
chip_gen: v6e
topology: v6e:2x2x1
jax: 0.10.0
libtpu: 0.0.40
codegen_flags: <defaults>
</compile_context>

<pallas_src>
import functools

import jax
import jax.numpy as jnp
from jax.experimental import pallas as pl
from jax.experimental.pallas import tpu as pltpu

LANE = 128  # losses/params packed along the TPU lane dimension


def _awl_kernel(packed_ref, out_ref, *, num):
    x = packed_ref[...]                 # (2, n_pad) f32 in VMEM
    l = x[0:1, :]                       # (1, n_pad) losses (padded with 1.0)
    p = x[1:2, :]                       # (1, n_pad) params (padded with 1.0)
    p2 = p * p
    # 0.5 / params**2 * loss + log(1 + params**2)
    # (padded lanes have p=1, l=1 so the term stays finite; masked out below)
    term = (0.5 / p2) * l + jnp.log1p(p2)
    # Build the validity mask in-kernel from an iota (no extra input DMA).
    lane = jax.lax.broadcasted_iota(jnp.int32, term.shape, 1)
    mask = (lane < num).astype(term.dtype)
    # Reduce to a single scalar and write it to the SMEM output.
    out_ref[0, 0] = jnp.sum(term * mask)


def automatic_weighted_loss(losses, params):
    """losses: (num,) f32 array of scalar task losses; params: (num,) f32."""
    num = losses.shape[0]
    assert params.shape == (num,)
    # NOTE: lane-only padding; fine for the small `num` this module targets.
    # TODO(synk): switch to a sublane-dense (8, 128*k) layout if num grows large.
    n_pad = max(LANE, ((num + LANE - 1) // LANE) * LANE)

    # Single packed input: row 0 = losses, row 1 = params.  One pad op,
    # constant 1.0 so 0.5 / params**2 stays finite on the padded lanes.
    packed = jnp.stack(
        [losses.astype(jnp.float32), params.astype(jnp.float32)], axis=0)
    packed = jnp.pad(packed, ((0, 0), (0, n_pad - num)), constant_values=1.0)

    out = pl.pallas_call(
        functools.partial(_awl_kernel, num=num),
        out_shape=jax.ShapeDtypeStruct((1, 1), jnp.float32),
        in_specs=[pl.BlockSpec(memory_space=pltpu.MemorySpace.VMEM)],
        out_specs=pl.BlockSpec(memory_space=pltpu.MemorySpace.SMEM),
    )(packed)
    return out[0, 0]


if __name__ == "__main__":
    num = 2
    key = jax.random.PRNGKey(0)

    # Deterministic parameter init, matching torch.ones(num) in __init__.
    params = jnp.ones((num,), jnp.float32)

    # Example multi-task scalar losses (what the module receives in forward).
    losses = jax.random.uniform(key, (num,), jnp.float32, minval=0.5, maxval=2.0)

    result = automatic_weighted_loss(losses, params)
    result = jax.block_until_ready(result)

    # Reference check (plain JAX, same math as the PyTorch forward).
    p2 = params * params
    ref = jnp.sum(0.5 / p2 * losses + jnp.log1p(p2))
    assert jnp.allclose(result, ref, rtol=1e-5, atol=1e-5), (result, ref)

    print("KERNEL_OK")
</pallas_src>

<mosaic_0001>
module attributes {stable_mosaic.version = 11 : i64} {
  func.func @_awl_kernel(%arg0: memref<2x128xf32, #tpu.memory_space<vmem>>, %arg1: memref<1x1xf32, #tpu.memory_space<smem>>) attributes {dimension_semantics = [], scalar_prefetch = 0 : i64, scratch_operands = 0 : i64, tpu.core_type = #tpu.core_type<tc>} {
    %c0 = arith.constant 0 : index
    %c0_0 = arith.constant 0 : index
    %0 = vector.load %arg0[%c0, %c0_0] : memref<2x128xf32, #tpu.memory_space<vmem>>, vector<2x128xf32>
    %1 = vector.extract_strided_slice %0 {offsets = [0, 0], sizes = [1, 128], strides = [1, 1]} : vector<2x128xf32> to vector<1x128xf32>
    %2 = vector.extract_strided_slice %0 {offsets = [1, 0], sizes = [1, 128], strides = [1, 1]} : vector<2x128xf32> to vector<1x128xf32>
    %3 = arith.mulf %2, %2 : vector<1x128xf32>
    %cst = arith.constant 5.000000e-01 : f32
    %4 = vector.broadcast %cst : f32 to vector<1x128xf32>
    %5 = arith.divf %4, %3 : vector<1x128xf32>
    %6 = arith.mulf %5, %1 : vector<1x128xf32>
    %7 = math.log1p %3 : vector<1x128xf32>
    %8 = arith.addf %6, %7 : vector<1x128xf32>
    %9 = tpu.iota {dimensions = array<i32: 1>} : vector<1x128xi32>
    %c2_i32 = arith.constant 2 : i32
    %10 = vector.broadcast %c2_i32 : i32 to vector<1x128xi32>
    %11 = arith.cmpi slt, %9, %10 : vector<1x128xi32>
    %12 = arith.extui %11 : vector<1x128xi1> to vector<1x128xi32>
    %13 = arith.sitofp %12 : vector<1x128xi32> to vector<1x128xf32>
    %14 = arith.mulf %8, %13 : vector<1x128xf32>
    %15 = vector.shape_cast %14 : vector<1x128xf32> to vector<1x1x128xf32>
    %cst_1 = arith.constant dense<0.000000e+00> : vector<1xf32>
    %16 = vector.multi_reduction <add>, %15, %cst_1 [1, 2] : vector<1x1x128xf32> to vector<1xf32>
    %17 = vector.shape_cast %16 : vector<1xf32> to vector<1x1x1xf32>
    %18 = vector.extract %17[0, 0, 0] : f32 from vector<1x1x1xf32>
    %c0_2 = arith.constant 0 : index
    %c0_3 = arith.constant 0 : index
    %19 = memref.load %arg1[%c0_2, %c0_3] : memref<1x1xf32, #tpu.memory_space<smem>>
    memref.store %18, %arg1[%c0_2, %c0_3] : memref<1x1xf32, #tpu.memory_space<smem>>
    return
  }
}

</mosaic_0001>

<llo_original>
// kernel: tpu_custom_call.1
$region0: #{tpu_custom_call.1}
  #allocation0 [shape = 'u32[]', space=smem, size = 0x4, offset = 0x4, fixed_abs, tag = 'smem constant byte address 0x4 - core index']
  #allocation1 [shape = 'u32[144,128]{1,0:T(1,128)}', space=vmem, size = 0x12000, scoped, tag = 'internal scratch']
  %s0 = inlined_call_operand.hbm [shape: f32[2,128], index: 0, kind: input, shape index: {}]
  %s1 = inlined_call_operand.hbm [shape: f32[1,1], index: 1, kind: output, shape index: {}]
  %s2 = sld [smem:[#allocation0]]
  $region18: #{tpu_custom_call.1} parent=0
    _
  %s4 = ssub.s32 1, %s2
  %s5 = scalar_select 0, %s4, %s2
  $region1: #{tpu_custom_call.1} parent=0
    #allocation2 [shape = 'u8[1024]{0}', space=vmem, size = 0x400, scoped, tag = 'input window, operand 0, single buffered']
    #allocation3 [shape = 's32[1]{0}', space=sflag, size = 0x4, scoped, tag = 'scoped memory for tpu_custom_call.1']
    #allocation4 [shape = 's32[1]{0}', space=sflag, size = 0x4, scoped, tag = 'scoped memory for tpu_custom_call.1']
    #allocation5 [shape = 'u8[512]{0}', space=smem, size = 0x200, scoped, tag = 'output window, operand 0, single buffered']
    %6 = vsyncpa [#allocation3], 0
    %7 = vsyncpa [#allocation4], 0
    // Predicated region
    $region2: #{tpu_custom_call.1} parent=1 // pred_check
      _
    $region3: #{tpu_custom_call.1} parent=1 // pred_check_branch
      %9 = sbr.rel (0) target = $region5
    $region4: #{tpu_custom_call.1} parent=1 // pred_region
      %s11 = ssub.s32 32, 32
      %12 = vsyncadd [#allocation3], %s11
      %s14 = sshll.u32 [#allocation2], 4
      %s15 = int_to_ptr.vmem [resolvable:$true] %s14
      %17 = dma.hbm_to_vmem [thread:$0]  %s0, 32, %s15, [#allocation3]
    $region5: #{tpu_custom_call.1} parent=1 // pred_fallthru
      _
    // Predicated region
    $region6: #{tpu_custom_call.1} parent=1 // pred_check
      _
    $region7: #{tpu_custom_call.1} parent=1 // pred_check_branch
      %19 = sbr.rel (0) target = $region9
    $region8: #{tpu_custom_call.1} parent=1 // pred_region
      %20 = dma.done [#allocation3], 32
    $region9: #{tpu_custom_call.1} parent=1 // pred_fallthru
      _
    %v21 = vld [vmem:[#allocation2] sm:$0x3]
    %v22 = vmul.f32 %v21, %v21
    %v23 = vrcp.pop %v22
    %v24 = vmul.f32 0.5, %v23
    %v26 = vrot.slane %v21, 7
    %v28 = vmul.f32 %v24, %v26
    %v29 = vadd.f32 %v22, 1.0
    %v30 = vlog2.pop %v29
    %v31 = vmul.f32 %v30, 0.6931472
    %v32 = vmul.f32 -0.5, %v22
    %v33 = vadd.f32 %v32, 1.0
    %v34 = vmul.f32 %v33, %v22
    %v35 = vand.u32 2147483647, %v22
    %vm36 = vcmp.lt.f32.partialorder %v35, 0.0004427343
    %v37 = vsel %vm36, %v34, %v31
    %v38 = vadd.f32 %v28, %v37
    %v39 = vlaneseq
    %v40 = vand.u32 %v39, 127
    %vm41 = vcmp.lt.s32.totalorder %v40, 2
    %v42 = vsel %vm41, 1, 0
    %v43 = vcvt.s32.f32 %v42
    %v44 = vmul.f32 %v38, %v43
    %v46 = vrot.slane %v44, 1
    %vm48 = vcmask 1040384
    %v49 = vsel %vm48, %v46, 0.0
    %50 = vadd.xlane.f32.xlu0 %v49
    %v51 = vpop.xlane.xlu0 %50
    %v52 = vrot.slane %v51, 4
    %v53 = vadd.f32 %v51, %v52
    %v54 = vrot.slane %v53, 2
    %v55 = vadd.f32 %v53, %v54
    %v56 = vrot.slane %v55, 1
    %v57 = vadd.f32 %v55, %v56
    %s58 = vtos %v57
    %s59 = scalar_lea.smem [#allocation5], 0
    %60 = sst [smem:[%s59]] %s58
    // Predicated region
    $region10: #{tpu_custom_call.1} parent=1 // pred_check
      _
    $region11: #{tpu_custom_call.1} parent=1 // pred_check_branch
      %62 = sbr.rel (0) target = $region13
    $region12: #{tpu_custom_call.1} parent=1 // pred_region
      %s64 = ssub.s32 16, 16
      %65 = vsyncadd [#allocation4], %s64
      %68 = dma.smem_to_hbm [#allocation5], 16, %s1, [#allocation4]
    $region13: #{tpu_custom_call.1} parent=1 // pred_fallthru
      _
    // Predicated region
    $region14: #{tpu_custom_call.1} parent=1 // pred_check
      _
    $region15: #{tpu_custom_call.1} parent=1 // pred_check_branch
      %70 = sbr.rel (0) target = $region17
    $region16: #{tpu_custom_call.1} parent=1 // pred_region
      %71 = dma.done [#allocation4], 16
    $region17: #{tpu_custom_call.1} parent=1 // pred_fallthru
      _
    %72 = sfence
    %73 = vsyncpa [#allocation3], 1
    %74 = vsyncpa [#allocation4], 1

</llo_original>
